<compile_context>
chip_gen: v7x
topology: tpu7x:2x2x1
jax: 0.10.0
libtpu: 0.0.40
codegen_flags: <defaults>
</compile_context>

<pallas_src>
import math
import functools

import jax
import jax.numpy as jnp
from jax.experimental import pallas as pl
from jax.experimental.pallas import tpu as pltpu


_GELU_C = math.sqrt(2.0 / math.pi)
_LANE = 128
_SUBLANE = 16          # bf16 sublane packing minimum for row tiles


def _round_up(n, m):
    return ((n + m - 1) // m) * m


def _const_spec(shape, index_map, constant):
    """BlockSpec; single-buffer blocks whose index is constant over the grid."""
    if constant:
        try:
            return pl.BlockSpec(shape, index_map, pipeline_mode=pl.Buffered(1))
        except Exception:          # older jax without pipeline_mode / Buffered
            pass
    return pl.BlockSpec(shape, index_map)


def _pick_hidden_pad(h):
    """Pad hidden dim so a >=256-wide lane-aligned tile always divides it."""
    h_p = _round_up(h, _LANE)
    if h_p <= 512:
        return h_p
    for tk in (512, 384, 256):
        if h_p % tk == 0:
            return h_p
    return _round_up(h_p, 512)


def _pick_tk(h_pad, tk_target):
    if h_pad <= tk_target:
        return h_pad
    for tk in (512, 384, 256):
        if tk <= tk_target and h_pad % tk == 0:
            return tk
    return _LANE     # unreachable when params come from prepare_mlp_params


def _pad_2d(a, shape, dtype):
    a = a.astype(dtype)
    if a.shape == shape:
        return a
    return jnp.zeros(shape, dtype).at[: a.shape[0], : a.shape[1]].set(a)


def prepare_mlp_params(w1, b1, w2, b2, compute_dtype=jnp.bfloat16):
    """Pad feature axes to lane multiples and cast weights to the MXU dtype.

    Done ONCE at parameter-load time (outside the per-call jit) so the forward
    pass never re-materializes padded weight copies in HBM.
    """
    d_in, h = w1.shape
    assert b1.shape == (h,), (b1.shape, h)
    assert w2.shape[0] == h, ("module requires n_state == n_llm_embed", w2.shape, h)
    d_out = w2.shape[1]
    assert b2.shape == (d_out,), (b2.shape, d_out)

    d_in_p = _round_up(d_in, _LANE)
    d_out_p = _round_up(d_out, _LANE)
    h_p = _pick_hidden_pad(h)

    return {
        "w1": _pad_2d(w1, (d_in_p, h_p), compute_dtype),
        "b1": _pad_2d(b1.reshape(1, -1), (1, h_p), jnp.float32),
        "w2": _pad_2d(w2, (h_p, d_out_p), compute_dtype),
        "b2": _pad_2d(b2.reshape(1, -1), (1, d_out_p), jnp.float32),
        "d_out": d_out,
    }


# ----------------------------------------------------------------------- kernels
def _mlp_resident_kernel(x_ref, w1_ref, b1_ref, w2_ref, b2_ref, o_ref):
    # Whole (padded) W1/W2 are VMEM-resident; grid = row tiles only.
    h = jnp.dot(x_ref[...], w1_ref[...], preferred_element_type=jnp.float32)
    h = h + b1_ref[...]                                        # f32 bias add
    # gelu_new (f32): 0.5*h*(1 + tanh(sqrt(2/pi)*(h + 0.044715*h^3))); h*h*h on VPU.
    h = 0.5 * h * (1.0 + jnp.tanh(_GELU_C * (h + 0.044715 * (h * h * h))))
    out = jnp.dot(h.astype(w2_ref.dtype), w2_ref[...],
                  preferred_element_type=jnp.float32)
    # Dropout (eval) == identity.
    o_ref[...] = (out + b2_ref[...]).astype(o_ref.dtype)


def _mlp_streamed_kernel(x_ref, w1_ref, b1_ref, w2_ref, b2_ref, o_ref, acc_ref):
    # Hidden axis streamed; f32 accumulator resident across the k axis.
    k = pl.program_id(1)

    @pl.when(k == 0)
    def _():
        acc_ref[...] = jnp.zeros_like(acc_ref)

    h = jnp.dot(x_ref[...], w1_ref[...], preferred_element_type=jnp.float32)
    h = h + b1_ref[...]
    h = 0.5 * h * (1.0 + jnp.tanh(_GELU_C * (h + 0.044715 * (h * h * h))))
    acc_ref[...] += jnp.dot(h.astype(w2_ref.dtype), w2_ref[...],
                            preferred_element_type=jnp.float32)

    @pl.when(k == pl.num_programs(1) - 1)
    def _():
        o_ref[...] = (acc_ref[...] + b2_ref[...]).astype(o_ref.dtype)


# ----------------------------------------------------------------------- wrapper
def _vmem_capacity_bytes():
    try:
        return int(pltpu.get_tpu_info().vmem_capacity_bytes)
    except Exception:
        return 64 * 1024 * 1024        # conservative (v7x per-core VMEM)


@functools.partial(jax.jit, static_argnames=("d_out", "force_streamed", "tm", "tk"))
def _mlp_forward_impl(x, w1p, b1p, w2p, b2p, *, d_out, force_streamed=False,
                      tm=None, tk=512):
    B, S, d_in = x.shape
    d_in_p, h_pad = w1p.shape
    h_pad2, d_out_p = w2p.shape
    assert h_pad2 == h_pad and d_in <= d_in_p and d_out <= d_out_p

    cdtype = w1p.dtype
    cb = jnp.dtype(cdtype).itemsize          # compute-dtype bytes (bf16: 2)
    ob = jnp.dtype(x.dtype).itemsize         # output-dtype bytes

    M = B * S

    # ---- VMEM budgeting (per-generation via get_tpu_info) -------------------
    vmem_cap = _vmem_capacity_bytes()
    vmem_limit = max(32 * 1024 * 1024,
                     min(vmem_cap - 8 * 1024 * 1024, 112 * 1024 * 1024))
    budget = int(vmem_limit * 0.88)          # headroom for compiler scratch

    weight_bytes = (d_in_p * h_pad + h_pad * d_out_p) * cb + (h_pad + d_out_p) * 4

    def resident_fits(tm_):
        io = 2 * tm_ * d_in_p * cb + 2 * tm_ * d_out_p * ob
        interm = tm_ * h_pad * (4 + cb) + tm_ * d_out_p * 4
        return weight_bytes + io + interm <= budget

    def streamed_fits(tm_, tk_):
        io = 2 * tm_ * d_in_p * cb + 2 * tm_ * d_out_p * ob
        slabs = 2 * (d_in_p * tk_ + tk_ * d_out_p) * cb + 2 * (tk_ + d_out_p) * 4
        acc = tm_ * d_out_p * 4
        interm = tm_ * tk_ * (4 + cb)
        return io + slabs + acc + interm <= budget

    # ---- tile / path selection (all static under jit) -----------------------
    path = None
    tm_eff = None
    tk_eff = None
    if not force_streamed:
        for cand in ((tm,) if tm is not None else (512, 256, 128)):
            tm_c = max(_SUBLANE, min(cand, _round_up(M, _SUBLANE)))
            if resident_fits(tm_c):
                path, tm_eff = "resident", tm_c
                break

    if path is None:
        # Streamed fallback: big row tiles to cross the HBM-roofline break-even.
        path = "streamed"
        tk_eff = _pick_tk(h_pad, tk)
        tm_c = max(_SUBLANE, min(tm if tm is not None else 1024,
                                 _round_up(M, _SUBLANE)))
        while tm_c > 256 and not streamed_fits(tm_c, tk_eff):
            tm_c = max(256, tm_c // 2)
        tm_eff = tm_c

    # v7x megacore: guarantee >= 2 row tiles when it is free (resident path) or
    # when the smaller tile still clears the streamed-path break-even.
    if _round_up(M, tm_eff) // tm_eff < 2:
        half = _round_up((M + 1) // 2, _SUBLANE)
        if half < tm_eff and (path == "resident" or half >= 512):
            tm_eff = half

    M_pad = _round_up(M, tm_eff)

    # ---- pad + cast activations (cheap, fused by XLA) ------------------------
    x2d = x.reshape(M, d_in).astype(cdtype)
    if (M_pad, d_in_p) != (M, d_in):
        x2d = jnp.zeros((M_pad, d_in_p), cdtype).at[:M, :d_in].set(x2d)

    def _compiler(sem):
        return pltpu.CompilerParams(dimension_semantics=sem,
                                    vmem_limit_bytes=vmem_limit)

    if path == "resident":
        out2d = pl.pallas_call(
            _mlp_resident_kernel,
            out_shape=jax.ShapeDtypeStruct((M_pad, d_out_p), x.dtype),
            grid_spec=pltpu.PrefetchScalarGridSpec(
                num_scalar_prefetch=0,
                grid=(M_pad // tm_eff,),
                in_specs=[
                    pl.BlockSpec((tm_eff, d_in_p), lambda i: (i, 0)),         # x rows
                    _const_spec((d_in_p, h_pad), lambda i: (0, 0), True),     # W1 (resident)
                    _const_spec((1, h_pad), lambda i: (0, 0), True),          # b1
                    _const_spec((h_pad, d_out_p), lambda i: (0, 0), True),    # W2 (resident)
                    _const_spec((1, d_out_p), lambda i: (0, 0), True),        # b2
                ],
                out_specs=pl.BlockSpec((tm_eff, d_out_p), lambda i: (i, 0)),
            ),
            compiler_params=_compiler(("parallel",)),
        )(x2d, w1p, b1p, w2p, b2p)
    else:
        k_steps = h_pad // tk_eff
        consts_w = (k_steps == 1)            # weight slabs constant over whole grid
        out2d = pl.pallas_call(
            _mlp_streamed_kernel,
            out_shape=jax.ShapeDtypeStruct((M_pad, d_out_p), x.dtype),
            grid_spec=pltpu.PrefetchScalarGridSpec(
                num_scalar_prefetch=0,
                grid=(M_pad // tm_eff, k_steps),
                in_specs=[
                    pl.BlockSpec((tm_eff, d_in_p), lambda i, k: (i, 0)),            # x rows
                    _const_spec((d_in_p, tk_eff), lambda i, k: (0, k), consts_w),   # W1 slab
                    _const_spec((1, tk_eff), lambda i, k: (0, k), consts_w),        # b1 slab
                    _const_spec((tk_eff, d_out_p), lambda i, k: (k, 0), consts_w),  # W2 slab
                    _const_spec((1, d_out_p), lambda i, k: (0, 0), True),           # b2
                ],
                out_specs=pl.BlockSpec((tm_eff, d_out_p), lambda i, k: (i, 0)),
                scratch_shapes=[pltpu.VMEM((tm_eff, d_out_p), jnp.float32)],
            ),
            compiler_params=_compiler(("parallel", "arbitrary")),
        )(x2d, w1p, b1p, w2p, b2p)

    return out2d[:M, :d_out].reshape(B, S, d_out)


def mlp_forward(x, params, *, force_streamed=False, tm=None, tk=512):
    """x: (B, S, n_embd) -> (B, S, n_llm_embed output dim). params from prepare_mlp_params."""
    return _mlp_forward_impl(x, params["w1"], params["b1"], params["w2"],
                             params["b2"], d_out=params["d_out"],
                             force_streamed=force_streamed, tm=tm, tk=tk)


# ----------------------------------------------------------------------- reference / test
def _reference(x, w1, b1, w2, b2):
    xf = x.astype(jnp.float32)
    h = xf @ w1.astype(jnp.float32) + b1.astype(jnp.float32)
    h = 0.5 * h * (1.0 + jnp.tanh(_GELU_C * (h + 0.044715 * h * h * h)))
    out = h @ w2.astype(jnp.float32) + b2.astype(jnp.float32)
    return out.astype(x.dtype)


if __name__ == "__main__":
    key = jax.random.PRNGKey(0)

    # --- Test 1: module-consistent small config (resident-weight path) ---------
    B, S = 2, 8
    n_embd, n_state, n_llm_embed = 32, 48, 48
    kx, k1, kb1, k2, kb2, key = jax.random.split(key, 6)
    x = jax.random.normal(kx, (B, S, n_embd), dtype=jnp.float32)
    w1 = jax.random.normal(k1, (n_embd, n_state), dtype=jnp.float32) * 0.02      # c_fc.weight
    b1 = jax.random.normal(kb1, (n_state,), dtype=jnp.float32) * 0.02            # c_fc.bias
    w2 = jax.random.normal(k2, (n_llm_embed, n_embd), dtype=jnp.float32) * 0.02  # c_proj.weight
    b2 = jax.random.normal(kb2, (n_embd,), dtype=jnp.float32) * 0.02             # c_proj.bias

    params = prepare_mlp_params(w1, b1, w2, b2)            # pads + casts to bf16 once
    out = mlp_forward(x, params)
    jax.block_until_ready(out)
    ref = _reference(x, w1, b1, w2, b2)
    assert out.shape == (B, S, n_embd), out.shape
    err = float(jnp.max(jnp.abs(out.astype(jnp.float32) - ref.astype(jnp.float32))))
    assert err < 3e-3, err                                   # bf16 MXU, f32 accumulation

    # --- Test 2: exercise the streamed hidden-reduction path (k_steps > 1) -----
    n_embd2, n_state2 = 64, 1024
    kx, k1, kb1, k2, kb2, key = jax.random.split(key, 6)
    x2 = jax.random.normal(kx, (B, S, n_embd2), dtype=jnp.float32)
    w1b = jax.random.normal(k1, (n_embd2, n_state2), dtype=jnp.float32) * 0.02
    b1b = jax.random.normal(kb1, (n_state2,), dtype=jnp.float32) * 0.02
    w2b = jax.random.normal(k2, (n_state2, n_embd2), dtype=jnp.float32) * 0.02
    b2b = jax.random.normal(kb2, (n_embd2,), dtype=jnp.float32) * 0.02

    params2 = prepare_mlp_params(w1b, b1b, w2b, b2b)
    out2 = mlp_forward(x2, params2, force_streamed=True, tk=512)   # 2 hidden slabs
    jax.block_until_ready(out2)
    ref2 = _reference(x2, w1b, b1b, w2b, b2b)
    assert out2.shape == (B, S, n_embd2), out2.shape
    err2 = float(jnp.max(jnp.abs(out2.astype(jnp.float32) - ref2.astype(jnp.float32))))
    assert err2 < 6e-3, err2

    print("KERNEL_OK")
</pallas_src>

<mosaic_0001>
module attributes {stable_mosaic.version = 11 : i64} {
  func.func @_mlp_resident_kernel(%arg0: i32, %arg1: memref<16x128xbf16, #tpu.memory_space<vmem>>, %arg2: memref<128x128xbf16, #tpu.memory_space<vmem>>, %arg3: memref<1x128xf32, #tpu.memory_space<vmem>>, %arg4: memref<128x128xbf16, #tpu.memory_space<vmem>>, %arg5: memref<1x128xf32, #tpu.memory_space<vmem>>, %arg6: memref<16x128xf32, #tpu.memory_space<vmem>>) attributes {dimension_semantics = [#tpu.dimension_semantics<parallel>], iteration_bounds = array<i64: 1>, scalar_prefetch = 0 : i64, scratch_operands = 0 : i64, tpu.core_type = #tpu.core_type<tc>, window_params = [{transform_indices = @transform_0, window_bounds = array<i64: 16, 128>}, {pipeline_mode = #tpu.pipeline_mode<synchronous>, transform_indices = @transform_1, window_bounds = array<i64: 128, 128>}, {pipeline_mode = #tpu.pipeline_mode<synchronous>, transform_indices = @transform_2, window_bounds = array<i64: 1, 128>}, {pipeline_mode = #tpu.pipeline_mode<synchronous>, transform_indices = @transform_3, window_bounds = array<i64: 128, 128>}, {pipeline_mode = #tpu.pipeline_mode<synchronous>, transform_indices = @transform_4, window_bounds = array<i64: 1, 128>}, {transform_indices = @transform_5, window_bounds = array<i64: 16, 128>}]} {
    %c0 = arith.constant 0 : index
    %c0_0 = arith.constant 0 : index
    %0 = vector.load %arg1[%c0, %c0_0] : memref<16x128xbf16, #tpu.memory_space<vmem>>, vector<16x128xbf16>
    %c0_1 = arith.constant 0 : index
    %c0_2 = arith.constant 0 : index
    %1 = vector.load %arg2[%c0_1, %c0_2] : memref<128x128xbf16, #tpu.memory_space<vmem>>, vector<128x128xbf16>
    %cst = arith.constant dense<0.000000e+00> : vector<16x128xf32>
    %2 = tpu.matmul %0, %1, %cst {dimension_numbers = #tpu.dot_dimension_numbers<[1], [0], [0], [1], [0, 0, 1, 1], [], []>} : vector<16x128xbf16>, vector<128x128xbf16>, vector<16x128xf32> -> vector<16x128xf32>
    %c0_3 = arith.constant 0 : index
    %c0_4 = arith.constant 0 : index
    %3 = vector.load %arg3[%c0_3, %c0_4] : memref<1x128xf32, #tpu.memory_space<vmem>>, vector<1x128xf32>
    %4 = vector.broadcast %3 : vector<1x128xf32> to vector<16x128xf32>
    %5 = arith.addf %2, %4 : vector<16x128xf32>
    %cst_5 = arith.constant 5.000000e-01 : f32
    %6 = vector.broadcast %cst_5 : f32 to vector<16x128xf32>
    %7 = arith.mulf %6, %5 : vector<16x128xf32>
    %8 = arith.mulf %5, %5 : vector<16x128xf32>
    %9 = arith.mulf %8, %5 : vector<16x128xf32>
    %cst_6 = arith.constant 4.471500e-02 : f32
    %10 = vector.broadcast %cst_6 : f32 to vector<16x128xf32>
    %11 = arith.mulf %10, %9 : vector<16x128xf32>
    %12 = arith.addf %5, %11 : vector<16x128xf32>
    %cst_7 = arith.constant 0.797884583 : f32
    %13 = vector.broadcast %cst_7 : f32 to vector<16x128xf32>
    %14 = arith.mulf %13, %12 : vector<16x128xf32>
    %15 = math.tanh %14 : vector<16x128xf32>
    %cst_8 = arith.constant 1.000000e+00 : f32
    %16 = vector.broadcast %cst_8 : f32 to vector<16x128xf32>
    %17 = arith.addf %16, %15 : vector<16x128xf32>
    %18 = arith.mulf %7, %17 : vector<16x128xf32>
    %19 = arith.truncf %18 : vector<16x128xf32> to vector<16x128xbf16>
    %c0_9 = arith.constant 0 : index
    %c0_10 = arith.constant 0 : index
    %20 = vector.load %arg4[%c0_9, %c0_10] : memref<128x128xbf16, #tpu.memory_space<vmem>>, vector<128x128xbf16>
    %cst_11 = arith.constant dense<0.000000e+00> : vector<16x128xf32>
    %21 = tpu.matmul %19, %20, %cst_11 {dimension_numbers = #tpu.dot_dimension_numbers<[1], [0], [0], [1], [0, 0, 1, 1], [], []>} : vector<16x128xbf16>, vector<128x128xbf16>, vector<16x128xf32> -> vector<16x128xf32>
    %c0_12 = arith.constant 0 : index
    %c0_13 = arith.constant 0 : index
    %22 = vector.load %arg5[%c0_12, %c0_13] : memref<1x128xf32, #tpu.memory_space<vmem>>, vector<1x128xf32>
    %23 = vector.broadcast %22 : vector<1x128xf32> to vector<16x128xf32>
    %24 = arith.addf %21, %23 : vector<16x128xf32>
    %c0_14 = arith.constant 0 : index
    %c0_15 = arith.constant 0 : index
    %25 = vector.load %arg6[%c0_14, %c0_15] : memref<16x128xf32, #tpu.memory_space<vmem>>, vector<16x128xf32>
    tpu.vector_store %arg6[%c0_14, %c0_15], %24 {strides = array<i32>} : memref<16x128xf32, #tpu.memory_space<vmem>>, vector<16x128xf32>,
    return
  }
  func.func @transform_0(%arg0: i32) -> (i32, i32) {
    %c0_i32 = arith.constant 0 : i32
    %c0_i32_0 = arith.constant 0 : i32
    return %arg0, %c0_i32 : i32, i32
  }
  func.func @transform_1(%arg0: i32) -> (i32, i32) {
    %c0_i32 = arith.constant 0 : i32
    %c0_i32_0 = arith.constant 0 : i32
    %c0_i32_1 = arith.constant 0 : i32
    return %c0_i32, %c0_i32_0 : i32, i32
  }
  func.func @transform_2(%arg0: i32) -> (i32, i32) {
    %c0_i32 = arith.constant 0 : i32
    %c0_i32_0 = arith.constant 0 : i32
    %c0_i32_1 = arith.constant 0 : i32
    return %c0_i32, %c0_i32_0 : i32, i32
  }
  func.func @transform_3(%arg0: i32) -> (i32, i32) {
    %c0_i32 = arith.constant 0 : i32
    %c0_i32_0 = arith.constant 0 : i32
    %c0_i32_1 = arith.constant 0 : i32
    return %c0_i32, %c0_i32_0 : i32, i32
  }
  func.func @transform_4(%arg0: i32) -> (i32, i32) {
    %c0_i32 = arith.constant 0 : i32
    %c0_i32_0 = arith.constant 0 : i32
    %c0_i32_1 = arith.constant 0 : i32
    return %c0_i32, %c0_i32_0 : i32, i32
  }
  func.func @transform_5(%arg0: i32) -> (i32, i32) {
    %c0_i32 = arith.constant 0 : i32
    %c0_i32_0 = arith.constant 0 : i32
    return %arg0, %c0_i32 : i32, i32
  }
}

</mosaic_0001>

<llo_original>
// kernel: _mlp_forward_impl.1
$region0: #{_mlp_forward_impl.1}
  #allocation0 [shape = 'u32[]', space=smem, size = 0x4, offset = 0x4, fixed_abs, tag = 'smem constant byte address 0x4 - core index']
  #allocation1 [shape = 'u32[144,128]{1,0:T(1,128)}', space=vmem, size = 0x12000, scoped, tag = 'internal scratch']
  %s0 = inlined_call_operand.vmem [shape: bf16[16,128], index: 0, kind: input, shape index: {}]
  %s1 = inlined_call_operand.hbm [shape: bf16[128,128], index: 1, kind: input, shape index: {}]
  %s2 = inlined_call_operand.vmem [shape: f32[1,128], index: 2, kind: input, shape index: {}]
  %s3 = inlined_call_operand.hbm [shape: bf16[128,128], index: 3, kind: input, shape index: {}]
  %s4 = inlined_call_operand.vmem [shape: f32[1,128], index: 4, kind: input, shape index: {}]
  %s5 = inlined_call_operand.vmem [shape: f32[16,128], index: 5, kind: output, shape index: {}]
  %s6 = sld [smem:[#allocation0]]
  $region38: #{_mlp_forward_impl.1} parent=0
    _
  %s8 = ssub.s32 1, %s6
  %s9 = scalar_select 0, %s8, %s6
  $region1: #{_mlp_forward_impl.1} parent=0
    #allocation2 [shape = 'u8[32768]{0}', space=vmem, size = 0x8000, scoped, tag = 'input window, operand 1, single buffered']
    #allocation3 [shape = 's32[1]{0}', space=sflag, size = 0x4, scoped, tag = 'scoped memory for _mlp_forward_impl.1']
    #allocation4 [shape = 'u8[32768]{0}', space=vmem, size = 0x8000, scoped, tag = 'input window, operand 3, single buffered']
    #allocation5 [shape = 's32[1]{0}', space=sflag, size = 0x4, scoped, tag = 'scoped memory for _mlp_forward_impl.1']
    %10 = vsyncpa [#allocation3], 0
    %11 = vsyncpa [#allocation5], 0
    // Predicated region
    $region2: #{_mlp_forward_impl.1} parent=1 // pred_check
      _
    $region3: #{_mlp_forward_impl.1} parent=1 // pred_check_branch
      %13 = sbr.rel (0) target = $region5
    $region4: #{_mlp_forward_impl.1} parent=1 // pred_region
      _
    $region5: #{_mlp_forward_impl.1} parent=1 // pred_fallthru
      _
    // Predicated region
    $region6: #{_mlp_forward_impl.1} parent=1 // pred_check
      _
    $region7: #{_mlp_forward_impl.1} parent=1 // pred_check_branch
      %15 = sbr.rel (0) target = $region9
    $region8: #{_mlp_forward_impl.1} parent=1 // pred_region
      %s17 = ssub.s32 1024, 1024
      %18 = vsyncadd [#allocation3], %s17
      %s19 = sshll.u32 [#allocation2], 4
      %s20 = int_to_ptr.vmem [resolvable:$true] %s19
      %25 = dma.hbm_to_vmem [thread:$0]  %s1, 1024, %s20, [#allocation3], 64, 64, 4
    $region9: #{_mlp_forward_impl.1} parent=1 // pred_fallthru
      _
    // Predicated region
    $region10: #{_mlp_forward_impl.1} parent=1 // pred_check
      _
    $region11: #{_mlp_forward_impl.1} parent=1 // pred_check_branch
      %27 = sbr.rel (0) target = $region13
    $region12: #{_mlp_forward_impl.1} parent=1 // pred_region
      _
    $region13: #{_mlp_forward_impl.1} parent=1 // pred_fallthru
      _
    // Predicated region
    $region14: #{_mlp_forward_impl.1} parent=1 // pred_check
      _
    $region15: #{_mlp_forward_impl.1} parent=1 // pred_check_branch
      %29 = sbr.rel (0) target = $region17
    $region16: #{_mlp_forward_impl.1} parent=1 // pred_region
      %s31 = ssub.s32 1024, 1024
      %32 = vsyncadd [#allocation5], %s31
      %s33 = sshll.u32 [#allocation4], 4
      %s34 = int_to_ptr.vmem [resolvable:$true] %s33
      %39 = dma.hbm_to_vmem [thread:$0]  %s3, 1024, %s34, [#allocation5], 64, 64, 4
    $region17: #{_mlp_forward_impl.1} parent=1 // pred_fallthru
      _
    // Predicated region
    $region18: #{_mlp_forward_impl.1} parent=1 // pred_check
      _
    $region19: #{_mlp_forward_impl.1} parent=1 // pred_check_branch
      %41 = sbr.rel (0) target = $region21
    $region20: #{_mlp_forward_impl.1} parent=1 // pred_region
      _
    $region21: #{_mlp_forward_impl.1} parent=1 // pred_fallthru
      _
    // Predicated region
    $region22: #{_mlp_forward_impl.1} parent=1 // pred_check
      _
    $region23: #{_mlp_forward_impl.1} parent=1 // pred_check_branch
      %43 = sbr.rel (0) target = $region25
    $region24: #{_mlp_forward_impl.1} parent=1 // pred_region
      %44 = dma.done [#allocation3], 1024
    $region25: #{_mlp_forward_impl.1} parent=1 // pred_fallthru
      _
    // Predicated region
    $region26: #{_mlp_forward_impl.1} parent=1 // pred_check
      _
    $region27: #{_mlp_forward_impl.1} parent=1 // pred_check_branch
      %46 = sbr.rel (0) target = $region29
    $region28: #{_mlp_forward_impl.1} parent=1 // pred_region
      %47 = dma.done [#allocation5], 1024
    $region29: #{_mlp_forward_impl.1} parent=1 // pred_fallthru
      _
    %v49 = vld [vmem:[%s0] sm:$0xf]
    %v50 = vld [vmem:[%s0 + $0x4] sm:$0xf]
    %v51 = vld [vmem:[#allocation2] sm:$0xf]
    %v52 = vld [vmem:[#allocation2 + $0x4] sm:$0xf]
    %v53 = vld [vmem:[#allocation2 + $0x8] sm:$0xf]
    %v54 = vld [vmem:[#allocation2 + $0xc] sm:$0xf]
    %v55 = vld [vmem:[#allocation2 + $0x10] sm:$0xf]
    %v56 = vld [vmem:[#allocation2 + $0x14] sm:$0xf]
    %v57 = vld [vmem:[#allocation2 + $0x18] sm:$0xf]
    %v58 = vld [vmem:[#allocation2 + $0x1c] sm:$0xf]
    %v59 = vld [vmem:[#allocation2 + $0x20] sm:$0xf]
    %v60 = vld [vmem:[#allocation2 + $0x24] sm:$0xf]
    %v61 = vld [vmem:[#allocation2 + $0x28] sm:$0xf]
    %v62 = vld [vmem:[#allocation2 + $0x2c] sm:$0xf]
    %v63 = vld [vmem:[#allocation2 + $0x30] sm:$0xf]
    %v64 = vld [vmem:[#allocation2 + $0x34] sm:$0xf]
    %v65 = vld [vmem:[#allocation2 + $0x38] sm:$0xf]
    %v66 = vld [vmem:[#allocation2 + $0x3c] sm:$0xf]
    %v67 = vld [vmem:[%s2] sm:$0x1]
    %v69 = vlaneseq
    %v70 = vshrl.u32 %v69, 7
    %v71 = vsub.s32 0, %v70
    %v72 = vrot.slane %v67, %v71
    %v76 = vunpack.c.l.b16 %v49
    %v77 = vunpack.c.l.b16 %v50
    %v78 = vpack.c.b16 %v77, %v76
    %v96 = vunpack.c.l.b16 %v51
    %v97 = vunpack.c.l.b16 %v52
    %v98 = vunpack.c.l.b16 %v53
    %v99 = vunpack.c.l.b16 %v54
    %v100 = vunpack.c.l.b16 %v55
    %v101 = vunpack.c.l.b16 %v56
    %v102 = vunpack.c.l.b16 %v57
    %v103 = vunpack.c.l.b16 %v58
    %v104 = vunpack.c.l.b16 %v59
    %v105 = vunpack.c.l.b16 %v60
    %v106 = vunpack.c.l.b16 %v61
    %v107 = vunpack.c.l.b16 %v62
    %v108 = vunpack.c.l.b16 %v63
    %v109 = vunpack.c.l.b16 %v64
    %v110 = vunpack.c.l.b16 %v65
    %v111 = vunpack.c.l.b16 %v66
    %v112 = vpack.c.b16 %v97, %v96
    %v113 = vpack.c.b16 %v99, %v98
    %v114 = vpack.c.b16 %v101, %v100
    %v115 = vpack.c.b16 %v103, %v102
    %v116 = vpack.c.b16 %v105, %v104
    %v117 = vpack.c.b16 %v107, %v106
    %v118 = vpack.c.b16 %v109, %v108
    %v119 = vpack.c.b16 %v111, %v110
    %128 = vmatprep.subr.bf16.mxu0 0
    %129 = vmatpush1.bf16.msra.mxu0 %v112
    %130 = vmatprep.subr.bf16.mxu0 0
    %131 = vmatpush1.bf16.msra.mxu0 %v113
    %132 = vmatprep.subr.bf16.mxu0 0
    %133 = vmatpush1.bf16.msra.mxu0 %v114
    %134 = vmatprep.subr.bf16.mxu0 0
    %135 = vmatpush1.bf16.msra.mxu0 %v115
    %136 = vmatprep.subr.bf16.mxu0 0
    %137 = vmatpush1.bf16.msra.mxu0 %v116
    %138 = vmatprep.subr.bf16.mxu0 0
    %139 = vmatpush1.bf16.msra.mxu0 %v117
    %140 = vmatprep.subr.bf16.mxu0 0
    %141 = vmatpush1.bf16.msra.mxu0 %v118
    %142 = vmatprep.subr.bf16.mxu0 0
    %143 = vmatpush1.bf16.msra.mxu0 %v119
    %144 = vmatprep.subr.bf16.mxu0 0
    %145 = vmatpush1.bf16.msra.mxu0 0
    %146 = vmatprep.subr.bf16.mxu0 0
    %147 = vmatpush1.bf16.msra.mxu0 0
    %148 = vmatprep.subr.bf16.mxu0 0
    %149 = vmatpush1.bf16.msra.mxu0 0
    %150 = vmatprep.subr.bf16.mxu0 0
    %151 = vmatpush1.bf16.msra.mxu0 0
    %152 = vmatprep.subr.bf16.mxu0 0
    %153 = vmatpush1.bf16.msra.mxu0 0
    %154 = vmatprep.subr.bf16.mxu0 0
    %155 = vmatpush1.bf16.msra.mxu0 0
    %156 = vmatprep.subr.bf16.mxu0 0
    %157 = vmatpush1.bf16.msra.mxu0 0
    %158 = vmatprep.subr.bf16.mxu0 0
    %159 = vmatpush1.bf16.msra.mxu0 0
    %160 = vmatprep.mubr.bf16.mxu0 0
    %161 = vmatmul.mubr.bf16.gmra.mrb[0].mxu0 %v78
    %v162 = vpop.f32.mrb[0].mxu0
    %v163 = vadd.f32 %v72, %v162
    %v164 = vpop.f32.mrb[0].mxu0
    %v165 = vpop.f32.mrb[0].mxu0
    %v166 = vadd.f32 %v72, %v165
    %v167 = vpop.f32.mrb[0].mxu0
    %168 = vdwg.mxu0
    %v169 = vmul.f32 %v163, 0.5
    %v170 = vmul.f32 %v166, 0.5
    %v171 = vmul.f32 %v163, %v163
    %v172 = vmul.f32 %v166, %v166
    %v173 = vmul.f32 %v171, %v163
    %v174 = vmul.f32 %v172, %v166
    %v175 = vmul.f32 %v173, 0.044715
    %v176 = vmul.f32 %v174, 0.044715
    %v177 = vadd.f32 %v163, %v175
    %v178 = vadd.f32 %v166, %v176
    %v179 = vmul.f32 %v177, 0.7978846
    %v180 = vmul.f32 %v178, 0.7978846
    %v181 = vtanh.pop %v179
    %v182 = vtanh.pop %v180
    %v183 = vadd.f32 %v181, 1.0
    %v184 = vadd.f32 %v182, 1.0
    %v185 = vmul.f32 %v169, %v183
    %v186 = vmul.f32 %v170, %v184
    %v187 = vpack.c.bf16 %v186, %v185
    %v188 = vld [vmem:[#allocation4] sm:$0xf]
    %v189 = vld [vmem:[#allocation4 + $0x4] sm:$0xf]
    %v190 = vld [vmem:[#allocation4 + $0x8] sm:$0xf]
    %v191 = vld [vmem:[#allocation4 + $0xc] sm:$0xf]
    %v192 = vld [vmem:[#allocation4 + $0x10] sm:$0xf]
    %v193 = vld [vmem:[#allocation4 + $0x14] sm:$0xf]
    %v194 = vld [vmem:[#allocation4 + $0x18] sm:$0xf]
    %v195 = vld [vmem:[#allocation4 + $0x1c] sm:$0xf]
    %v196 = vld [vmem:[#allocation4 + $0x20] sm:$0xf]
    %v197 = vld [vmem:[#allocation4 + $0x24] sm:$0xf]
    %v198 = vld [vmem:[#allocation4 + $0x28] sm:$0xf]
    %v199 = vld [vmem:[#allocation4 + $0x2c] sm:$0xf]
    %v200 = vld [vmem:[#allocation4 + $0x30] sm:$0xf]
    %v201 = vld [vmem:[#allocation4 + $0x34] sm:$0xf]
    %v202 = vld [vmem:[#allocation4 + $0x38] sm:$0xf]
    %v203 = vld [vmem:[#allocation4 + $0x3c] sm:$0xf]
    %v204 = vld [vmem:[%s4] sm:$0x1]
    %v206 = vlaneseq
    %v207 = vshrl.u32 %v206, 7
    %v208 = vsub.s32 0, %v207
    %v209 = vrot.slane %v204, %v208
    %v227 = vunpack.c.l.b16 %v188
    %v228 = vunpack.c.l.b16 %v189
    %v229 = vunpack.c.l.b16 %v190
    %v230 = vunpack.c.l.b16 %v191
    %v231 = vunpack.c.l.b16 %v192
    %v232 = vunpack.c.l.b16 %v193
    %v233 = vunpack.c.l.b16 %v194
    %v234 = vunpack.c.l.b16 %v195
    %v235 = vunpack.c.l.b16 %v196
    %v236 = vunpack.c.l.b16 %v197
    %v237 = vunpack.c.l.b16 %v198
    %v238 = vunpack.c.l.b16 %v199
    %v239 = vunpack.c.l.b16 %v200
    %v240 = vunpack.c.l.b16 %v201
    %v241 = vunpack.c.l.b16 %v202
    %v242 = vunpack.c.l.b16 %v203
    %v243 = vpack.c.b16 %v228, %v227
    %v244 = vpack.c.b16 %v230, %v229
    %v245 = vpack.c.b16 %v232, %v231
    %v246 = vpack.c.b16 %v234, %v233
    %v247 = vpack.c.b16 %v236, %v235
    %v248 = vpack.c.b16 %v238, %v237
    %v249 = vpack.c.b16 %v240, %v239
    %v250 = vpack.c.b16 %v242, %v241
    %259 = vmatprep.subr.bf16.mxu0 0
    %260 = vmatpush1.bf16.msra.mxu0 %v243
    %261 = vmatprep.subr.bf16.mxu0 0
    %262 = vmatpush1.bf16.msra.mxu0 %v244
    %263 = vmatprep.subr.bf16.mxu0 0
    %264 = vmatpush1.bf16.msra.mxu0 %v245
    %265 = vmatprep.subr.bf16.mxu0 0
    %266 = vmatpush1.bf16.msra.mxu0 %v246
    %267 = vmatprep.subr.bf16.mxu0 0
    %268 = vmatpush1.bf16.msra.mxu0 %v247
    %269 = vmatprep.subr.bf16.mxu0 0
    %270 = vmatpush1.bf16.msra.mxu0 %v248
    %271 = vmatprep.subr.bf16.mxu0 0
    %272 = vmatpush1.bf16.msra.mxu0 %v249
    %273 = vmatprep.subr.bf16.mxu0 0
    %274 = vmatpush1.bf16.msra.mxu0 %v250
    %275 = vmatprep.subr.bf16.mxu0 0
    %276 = vmatpush1.bf16.msra.mxu0 0
    %277 = vmatprep.subr.bf16.mxu0 0
    %278 = vmatpush1.bf16.msra.mxu0 0
    %279 = vmatprep.subr.bf16.mxu0 0
    %280 = vmatpush1.bf16.msra.mxu0 0
    %281 = vmatprep.subr.bf16.mxu0 0
    %282 = vmatpush1.bf16.msra.mxu0 0
    %283 = vmatprep.subr.bf16.mxu0 0
    %284 = vmatpush1.bf16.msra.mxu0 0
    %285 = vmatprep.subr.bf16.mxu0 0
    %286 = vmatpush1.bf16.msra.mxu0 0
    %287 = vmatprep.subr.bf16.mxu0 0
    %288 = vmatpush1.bf16.msra.mxu0 0
    %289 = vmatprep.subr.bf16.mxu0 0
    %290 = vmatpush1.bf16.msra.mxu0 0
    %291 = vmatprep.mubr.bf16.mxu0 0
    %292 = vmatmul.mubr.bf16.gmra.mrb[0].mxu0 %v187
    %v293 = vpop.f32.mrb[0].mxu0
    %v294 = vadd.f32 %v209, %v293
    %v295 = vpop.f32.mrb[0].mxu0
    %v296 = vpop.f32.mrb[0].mxu0
    %v297 = vadd.f32 %v209, %v296
    %v298 = vpop.f32.mrb[0].mxu0
    %299 = vdwg.mxu0
    %300 = vst [vmem:[%s5] sm:$0xff] %v294
    %301 = vst [vmem:[%s5 + $0x8] sm:$0xff] %v297
    // Predicated region
    $region30: #{_mlp_forward_impl.1} parent=1 // pred_check
      _
    $region31: #{_mlp_forward_impl.1} parent=1 // pred_check_branch
      %303 = sbr.rel (0) target = $region33
    $region32: #{_mlp_forward_impl.1} parent=1 // pred_region
      _
    $region33: #{_mlp_forward_impl.1} parent=1 // pred_fallthru
      _
    // Predicated region
    $region34: #{_mlp_forward_impl.1} parent=1 // pred_check
      _
    $region35: #{_mlp_forward_impl.1} parent=1 // pred_check_branch
      %305 = sbr.rel (0) target = $region37
    $region36: #{_mlp_forward_impl.1} parent=1 // pred_region
      _
    $region37: #{_mlp_forward_impl.1} parent=1 // pred_fallthru
      _
    %306 = vsyncpa [#allocation3], 1
    %307 = vsyncpa [#allocation5], 1

</llo_original>
